<compile_context>
chip_gen: v7x
topology: tpu7x:2x2x1
jax: 0.10.0
libtpu: 0.0.40
codegen_flags: <defaults>
</compile_context>

<pallas_src>
import math
import functools

import jax
import jax.numpy as jnp
from jax import lax
from jax.experimental import pallas as pl
from jax.experimental.pallas import tpu as pltpu


def _biaffine_kernel(e_ref, d_ref, we_ref, be_ref, wd_ref, bd_ref, u_ref, out_ref,
                     *, num_labels):
    # Per-batch-element tile.
    e_in = e_ref[0]          # (Le, De)
    d_in = d_ref[0]          # (Ld, Dd)

    # Augmented MLPs: last column of the weight is 0 and of the bias is 1, so the
    # ReLU output carries a constant 1 column -> e_aug = [e | 1], d_aug = [d | 1].
    e_aug = jnp.maximum(
        jnp.dot(e_in, we_ref[...], preferred_element_type=jnp.float32) + be_ref[...], 0.0)   # (Le, H+1)
    d_aug = jnp.maximum(
        jnp.dot(d_in, wd_ref[...], preferred_element_type=jnp.float32) + bd_ref[...], 0.0)   # (Ld, H+1)

    # Contract over the last dim of both operands (no materialized transpose).
    contract_last = (((1,), (1,)), ((), ()))

    # num_labels is small & static: unrolled loop, leading-dim indexing only.
    for l in range(num_labels):
        du = jnp.dot(d_aug, u_ref[l], preferred_element_type=jnp.float32)            # (Ld, H+1)
        bil = lax.dot_general(du, e_aug, contract_last,
                              preferred_element_type=jnp.float32)                    # (Ld, Le)
        # == d@U[l]@e^T + W_d[l]·d (bcast over Le) + W_e[l]·e (bcast over Ld) + b[l]
        out_ref[0, l] = bil.astype(out_ref.dtype)


def biaffine_attention(e_outputs, d_outputs, params):
    """Returns (B, Ld, Le, num_labels), matching the PyTorch module's output."""
    B, Le, De = e_outputs.shape
    _, Ld, Dd = d_outputs.shape
    H = params["we_mlp"].shape[1]
    L = params["W_e"].shape[0]
    Hp1 = H + 1
    f32 = jnp.float32

    # --- build augmented weights once in the wrapper (plain XLA, outside the kernel) ---
    we_aug = jnp.concatenate([params["we_mlp"], jnp.zeros((De, 1), f32)], axis=1)   # (De, H+1)
    be_aug = jnp.concatenate([params["be_mlp"], jnp.ones((1, 1), f32)], axis=1)     # (1,  H+1)
    wd_aug = jnp.concatenate([params["wd_mlp"], jnp.zeros((Dd, 1), f32)], axis=1)   # (Dd, H+1)
    bd_aug = jnp.concatenate([params["bd_mlp"], jnp.ones((1, 1), f32)], axis=1)     # (1,  H+1)

    # U_hat[l] = [[ U[l]      , W_d[l]^T ],
    #             [ W_e[l]    , b[l]     ]]   -> one bilinear form per label.
    u_hat = jnp.zeros((L, Hp1, Hp1), f32)
    u_hat = u_hat.at[:, :H, :H].set(params["U"].astype(f32))
    u_hat = u_hat.at[:, :H, H].set(params["W_d"].astype(f32))
    u_hat = u_hat.at[:, H, :H].set(params["W_e"].astype(f32))
    u_hat = u_hat.at[:, H, H].set(params["b"][:, 0, 0].astype(f32))

    kernel = functools.partial(_biaffine_kernel, num_labels=L)

    out = pl.pallas_call(
        kernel,
        grid=(B,),
        in_specs=[
            pl.BlockSpec((1, Le, De), lambda b: (b, 0, 0)),
            pl.BlockSpec((1, Ld, Dd), lambda b: (b, 0, 0)),
            pl.BlockSpec((De, Hp1), lambda b: (0, 0)),
            pl.BlockSpec((1, Hp1), lambda b: (0, 0)),
            pl.BlockSpec((Dd, Hp1), lambda b: (0, 0)),
            pl.BlockSpec((1, Hp1), lambda b: (0, 0)),
            pl.BlockSpec((L, Hp1, Hp1), lambda b: (0, 0, 0)),
        ],
        out_specs=pl.BlockSpec((1, L, Ld, Le), lambda b: (b, 0, 0, 0)),
        out_shape=jax.ShapeDtypeStruct((B, L, Ld, Le), f32),
        compiler_params=pltpu.CompilerParams(
            dimension_semantics=("parallel",)),
    )(e_outputs, d_outputs, we_aug, be_aug, wd_aug, bd_aug, u_hat)

    # Kernel is lane-dense in Le; convert to the PyTorch layout (B, Ld, Le, L).
    return jnp.transpose(out, (0, 2, 3, 1))


def _reference(e_outputs, d_outputs, params):
    """Pure-JAX mirror of the PyTorch forward."""
    e = jax.nn.relu(e_outputs @ params["we_mlp"] + params["be_mlp"])   # (B, Le, H)
    d = jax.nn.relu(d_outputs @ params["wd_mlp"] + params["bd_mlp"])   # (B, Ld, H)
    out_e = jnp.einsum("lh,beh->ble", params["W_e"], e)[:, :, None, :]   # (B, L, 1, Le)
    out_d = jnp.einsum("lh,bdh->bld", params["W_d"], d)[:, :, :, None]   # (B, L, Ld, 1)
    out_u = jnp.einsum("bdh,lhk,bek->blde", d, params["U"], e)           # (B, L, Ld, Le)
    out = out_e + out_d + out_u + params["b"][None]                      # (B, L, Ld, Le)
    return jnp.transpose(out, (0, 2, 3, 1))                              # (B, Ld, Le, L)


def _init_params(key, encoder_size, decoder_size, num_labels, hidden_size):
    def linear_init(k, fan_in, fan_out):
        kw, kb = jax.random.split(k)
        bound = 1.0 / math.sqrt(fan_in)
        w = jax.random.uniform(kw, (fan_in, fan_out), jnp.float32, -bound, bound)
        b = jax.random.uniform(kb, (1, fan_out), jnp.float32, -bound, bound)
        return w, b

    def xavier_normal(k, shape):
        fan_in, fan_out = shape[-1], shape[-2]
        std = math.sqrt(2.0 / (fan_in + fan_out))
        return std * jax.random.normal(k, shape, jnp.float32)

    ks = jax.random.split(key, 5)
    we_mlp, be_mlp = linear_init(ks[0], encoder_size, hidden_size)
    wd_mlp, bd_mlp = linear_init(ks[1], decoder_size, hidden_size)
    W_e = xavier_normal(ks[2], (num_labels, hidden_size))
    W_d = xavier_normal(ks[3], (num_labels, hidden_size))
    U = xavier_normal(ks[4], (num_labels, hidden_size, hidden_size))
    b = jnp.zeros((num_labels, 1, 1), jnp.float32)
    return dict(we_mlp=we_mlp, be_mlp=be_mlp, wd_mlp=wd_mlp, bd_mlp=bd_mlp,
                W_e=W_e, W_d=W_d, U=U, b=b)


if __name__ == "__main__":
    B = 2
    Le = Ld = 8                 # encoder / decoder sequence lengths
    encoder_size = decoder_size = 16
    hidden_size = 32
    num_labels = 4

    root = jax.random.PRNGKey(0)
    kE, kD, kP = jax.random.split(root, 3)

    e_outputs = jax.random.normal(kE, (B, Le, encoder_size), jnp.float32)
    d_outputs = jax.random.normal(kD, (B, Ld, decoder_size), jnp.float32)
    params = _init_params(kP, encoder_size, decoder_size, num_labels, hidden_size)

    out = biaffine_attention(e_outputs, d_outputs, params)
    out = jax.block_until_ready(out)

    ref = _reference(e_outputs, d_outputs, params)
    assert out.shape == (B, Ld, Le, num_labels), out.shape
    assert jnp.allclose(out, ref, rtol=1e-4, atol=1e-4)

    print("KERNEL_OK")
</pallas_src>

<mosaic_0001>
module attributes {stable_mosaic.version = 11 : i64} {
  func.func @_biaffine_kernel(%arg0: i32, %arg1: memref<1x8x16xf32, #tpu.memory_space<vmem>>, %arg2: memref<1x8x16xf32, #tpu.memory_space<vmem>>, %arg3: memref<16x33xf32, #tpu.memory_space<vmem>>, %arg4: memref<1x33xf32, #tpu.memory_space<vmem>>, %arg5: memref<16x33xf32, #tpu.memory_space<vmem>>, %arg6: memref<1x33xf32, #tpu.memory_space<vmem>>, %arg7: memref<4x33x33xf32, #tpu.memory_space<vmem>>, %arg8: memref<1x4x8x8xf32, #tpu.memory_space<vmem>>) attributes {dimension_semantics = [#tpu.dimension_semantics<parallel>], iteration_bounds = array<i64: 2>, scalar_prefetch = 0 : i64, scratch_operands = 0 : i64, tpu.core_type = #tpu.core_type<tc>, window_params = [{transform_indices = @transform_0, window_bounds = array<i64: 1, 8, 16>}, {transform_indices = @transform_1, window_bounds = array<i64: 1, 8, 16>}, {pipeline_mode = #tpu.pipeline_mode<synchronous>, transform_indices = @transform_2, window_bounds = array<i64: 16, 33>}, {pipeline_mode = #tpu.pipeline_mode<synchronous>, transform_indices = @transform_3, window_bounds = array<i64: 1, 33>}, {pipeline_mode = #tpu.pipeline_mode<synchronous>, transform_indices = @transform_4, window_bounds = array<i64: 16, 33>}, {pipeline_mode = #tpu.pipeline_mode<synchronous>, transform_indices = @transform_5, window_bounds = array<i64: 1, 33>}, {pipeline_mode = #tpu.pipeline_mode<synchronous>, transform_indices = @transform_6, window_bounds = array<i64: 4, 33, 33>}, {transform_indices = @transform_7, window_bounds = array<i64: 1, 4, 8, 8>}]} {
    %c0 = arith.constant 0 : index
    %c0_0 = arith.constant 0 : index
    %c0_1 = arith.constant 0 : index
    %0 = vector.load %arg1[%c0, %c0_0, %c0_1] : memref<1x8x16xf32, #tpu.memory_space<vmem>>, vector<1x8x16xf32>
    %1 = vector.shape_cast %0 : vector<1x8x16xf32> to vector<8x16xf32>
    %c0_2 = arith.constant 0 : index
    %c0_3 = arith.constant 0 : index
    %c0_4 = arith.constant 0 : index
    %2 = vector.load %arg2[%c0_2, %c0_3, %c0_4] : memref<1x8x16xf32, #tpu.memory_space<vmem>>, vector<1x8x16xf32>
    %3 = vector.shape_cast %2 : vector<1x8x16xf32> to vector<8x16xf32>
    %c0_5 = arith.constant 0 : index
    %c0_6 = arith.constant 0 : index
    %4 = vector.load %arg3[%c0_5, %c0_6] : memref<16x33xf32, #tpu.memory_space<vmem>>, vector<16x33xf32>
    %cst = arith.constant dense<0.000000e+00> : vector<8x33xf32>
    %5 = tpu.matmul %1, %4, %cst {dimension_numbers = #tpu.dot_dimension_numbers<[1], [0], [0], [1], [0, 0, 1, 1], [], []>} : vector<8x16xf32>, vector<16x33xf32>, vector<8x33xf32> -> vector<8x33xf32>
    %c0_7 = arith.constant 0 : index
    %c0_8 = arith.constant 0 : index
    %6 = vector.load %arg4[%c0_7, %c0_8] : memref<1x33xf32, #tpu.memory_space<vmem>>, vector<1x33xf32>
    %7 = vector.broadcast %6 : vector<1x33xf32> to vector<8x33xf32>
    %8 = arith.addf %5, %7 : vector<8x33xf32>
    %cst_9 = arith.constant 0.000000e+00 : f32
    %9 = vector.broadcast %cst_9 : f32 to vector<8x33xf32>
    %10 = arith.maximumf %8, %9 : vector<8x33xf32>
    %c0_10 = arith.constant 0 : index
    %c0_11 = arith.constant 0 : index
    %11 = vector.load %arg5[%c0_10, %c0_11] : memref<16x33xf32, #tpu.memory_space<vmem>>, vector<16x33xf32>
    %cst_12 = arith.constant dense<0.000000e+00> : vector<8x33xf32>
    %12 = tpu.matmul %3, %11, %cst_12 {dimension_numbers = #tpu.dot_dimension_numbers<[1], [0], [0], [1], [0, 0, 1, 1], [], []>} : vector<8x16xf32>, vector<16x33xf32>, vector<8x33xf32> -> vector<8x33xf32>
    %c0_13 = arith.constant 0 : index
    %c0_14 = arith.constant 0 : index
    %13 = vector.load %arg6[%c0_13, %c0_14] : memref<1x33xf32, #tpu.memory_space<vmem>>, vector<1x33xf32>
    %14 = vector.broadcast %13 : vector<1x33xf32> to vector<8x33xf32>
    %15 = arith.addf %12, %14 : vector<8x33xf32>
    %cst_15 = arith.constant 0.000000e+00 : f32
    %16 = vector.broadcast %cst_15 : f32 to vector<8x33xf32>
    %17 = arith.maximumf %15, %16 : vector<8x33xf32>
    %c0_16 = arith.constant 0 : index
    %c0_17 = arith.constant 0 : index
    %c0_18 = arith.constant 0 : index
    %18 = vector.load %arg7[%c0_16, %c0_17, %c0_18] : memref<4x33x33xf32, #tpu.memory_space<vmem>>, vector<1x33x33xf32>
    %19 = vector.shape_cast %18 : vector<1x33x33xf32> to vector<33x33xf32>
    %cst_19 = arith.constant dense<0.000000e+00> : vector<8x33xf32>
    %20 = tpu.matmul %17, %19, %cst_19 {dimension_numbers = #tpu.dot_dimension_numbers<[1], [0], [0], [1], [0, 0, 1, 1], [], []>} : vector<8x33xf32>, vector<33x33xf32>, vector<8x33xf32> -> vector<8x33xf32>
    %cst_20 = arith.constant dense<0.000000e+00> : vector<8x8xf32>
    %21 = tpu.matmul %20, %10, %cst_20 {dimension_numbers = #tpu.dot_dimension_numbers<[1], [1], [0], [0], [0, 0, 1, 0], [], []>} : vector<8x33xf32>, vector<8x33xf32>, vector<8x8xf32> -> vector<8x8xf32>
    %c0_21 = arith.constant 0 : index
    %c0_22 = arith.constant 0 : index
    %c0_23 = arith.constant 0 : index
    %c0_24 = arith.constant 0 : index
    %22 = vector.load %arg8[%c0_21, %c0_22, %c0_23, %c0_24] : memref<1x4x8x8xf32, #tpu.memory_space<vmem>>, vector<1x1x8x8xf32>
    %23 = vector.shape_cast %22 : vector<1x1x8x8xf32> to vector<8x8xf32>
    %24 = vector.shape_cast %21 : vector<8x8xf32> to vector<1x1x8x8xf32>
    tpu.vector_store %arg8[%c0_21, %c0_22, %c0_23, %c0_24], %24 {strides = array<i32>} : memref<1x4x8x8xf32, #tpu.memory_space<vmem>>, vector<1x1x8x8xf32>,
    %c1 = arith.constant 1 : index
    %c0_25 = arith.constant 0 : index
    %c0_26 = arith.constant 0 : index
    %25 = vector.load %arg7[%c1, %c0_25, %c0_26] : memref<4x33x33xf32, #tpu.memory_space<vmem>>, vector<1x33x33xf32>
    %26 = vector.shape_cast %25 : vector<1x33x33xf32> to vector<33x33xf32>
    %cst_27 = arith.constant dense<0.000000e+00> : vector<8x33xf32>
    %27 = tpu.matmul %17, %26, %cst_27 {dimension_numbers = #tpu.dot_dimension_numbers<[1], [0], [0], [1], [0, 0, 1, 1], [], []>} : vector<8x33xf32>, vector<33x33xf32>, vector<8x33xf32> -> vector<8x33xf32>
    %cst_28 = arith.constant dense<0.000000e+00> : vector<8x8xf32>
    %28 = tpu.matmul %27, %10, %cst_28 {dimension_numbers = #tpu.dot_dimension_numbers<[1], [1], [0], [0], [0, 0, 1, 0], [], []>} : vector<8x33xf32>, vector<8x33xf32>, vector<8x8xf32> -> vector<8x8xf32>
    %c0_29 = arith.constant 0 : index
    %c1_30 = arith.constant 1 : index
    %c0_31 = arith.constant 0 : index
    %c0_32 = arith.constant 0 : index
    %29 = vector.load %arg8[%c0_29, %c1_30, %c0_31, %c0_32] : memref<1x4x8x8xf32, #tpu.memory_space<vmem>>, vector<1x1x8x8xf32>
    %30 = vector.shape_cast %29 : vector<1x1x8x8xf32> to vector<8x8xf32>
    %31 = vector.shape_cast %28 : vector<8x8xf32> to vector<1x1x8x8xf32>
    tpu.vector_store %arg8[%c0_29, %c1_30, %c0_31, %c0_32], %31 {strides = array<i32>} : memref<1x4x8x8xf32, #tpu.memory_space<vmem>>, vector<1x1x8x8xf32>,
    %c2 = arith.constant 2 : index
    %c0_33 = arith.constant 0 : index
    %c0_34 = arith.constant 0 : index
    %32 = vector.load %arg7[%c2, %c0_33, %c0_34] : memref<4x33x33xf32, #tpu.memory_space<vmem>>, vector<1x33x33xf32>
    %33 = vector.shape_cast %32 : vector<1x33x33xf32> to vector<33x33xf32>
    %cst_35 = arith.constant dense<0.000000e+00> : vector<8x33xf32>
    %34 = tpu.matmul %17, %33, %cst_35 {dimension_numbers = #tpu.dot_dimension_numbers<[1], [0], [0], [1], [0, 0, 1, 1], [], []>} : vector<8x33xf32>, vector<33x33xf32>, vector<8x33xf32> -> vector<8x33xf32>
    %cst_36 = arith.constant dense<0.000000e+00> : vector<8x8xf32>
    %35 = tpu.matmul %34, %10, %cst_36 {dimension_numbers = #tpu.dot_dimension_numbers<[1], [1], [0], [0], [0, 0, 1, 0], [], []>} : vector<8x33xf32>, vector<8x33xf32>, vector<8x8xf32> -> vector<8x8xf32>
    %c0_37 = arith.constant 0 : index
    %c2_38 = arith.constant 2 : index
    %c0_39 = arith.constant 0 : index
    %c0_40 = arith.constant 0 : index
    %36 = vector.load %arg8[%c0_37, %c2_38, %c0_39, %c0_40] : memref<1x4x8x8xf32, #tpu.memory_space<vmem>>, vector<1x1x8x8xf32>
    %37 = vector.shape_cast %36 : vector<1x1x8x8xf32> to vector<8x8xf32>
    %38 = vector.shape_cast %35 : vector<8x8xf32> to vector<1x1x8x8xf32>
    tpu.vector_store %arg8[%c0_37, %c2_38, %c0_39, %c0_40], %38 {strides = array<i32>} : memref<1x4x8x8xf32, #tpu.memory_space<vmem>>, vector<1x1x8x8xf32>,
    %c3 = arith.constant 3 : index
    %c0_41 = arith.constant 0 : index
    %c0_42 = arith.constant 0 : index
    %39 = vector.load %arg7[%c3, %c0_41, %c0_42] : memref<4x33x33xf32, #tpu.memory_space<vmem>>, vector<1x33x33xf32>
    %40 = vector.shape_cast %39 : vector<1x33x33xf32> to vector<33x33xf32>
    %cst_43 = arith.constant dense<0.000000e+00> : vector<8x33xf32>
    %41 = tpu.matmul %17, %40, %cst_43 {dimension_numbers = #tpu.dot_dimension_numbers<[1], [0], [0], [1], [0, 0, 1, 1], [], []>} : vector<8x33xf32>, vector<33x33xf32>, vector<8x33xf32> -> vector<8x33xf32>
    %cst_44 = arith.constant dense<0.000000e+00> : vector<8x8xf32>
    %42 = tpu.matmul %41, %10, %cst_44 {dimension_numbers = #tpu.dot_dimension_numbers<[1], [1], [0], [0], [0, 0, 1, 0], [], []>} : vector<8x33xf32>, vector<8x33xf32>, vector<8x8xf32> -> vector<8x8xf32>
    %c0_45 = arith.constant 0 : index
    %c3_46 = arith.constant 3 : index
    %c0_47 = arith.constant 0 : index
    %c0_48 = arith.constant 0 : index
    %43 = vector.load %arg8[%c0_45, %c3_46, %c0_47, %c0_48] : memref<1x4x8x8xf32, #tpu.memory_space<vmem>>, vector<1x1x8x8xf32>
    %44 = vector.shape_cast %43 : vector<1x1x8x8xf32> to vector<8x8xf32>
    %45 = vector.shape_cast %42 : vector<8x8xf32> to vector<1x1x8x8xf32>
    tpu.vector_store %arg8[%c0_45, %c3_46, %c0_47, %c0_48], %45 {strides = array<i32>} : memref<1x4x8x8xf32, #tpu.memory_space<vmem>>, vector<1x1x8x8xf32>,
    return
  }
  func.func @transform_0(%arg0: i32) -> (i32, i32, i32) {
    %c0_i32 = arith.constant 0 : i32
    %c0_i32_0 = arith.constant 0 : i32
    %c0_i32_1 = arith.constant 0 : i32
    return %arg0, %c0_i32, %c0_i32_0 : i32, i32, i32
  }
  func.func @transform_1(%arg0: i32) -> (i32, i32, i32) {
    %c0_i32 = arith.constant 0 : i32
    %c0_i32_0 = arith.constant 0 : i32
    %c0_i32_1 = arith.constant 0 : i32
    return %arg0, %c0_i32, %c0_i32_0 : i32, i32, i32
  }
  func.func @transform_2(%arg0: i32) -> (i32, i32) {
    %c0_i32 = arith.constant 0 : i32
    %c0_i32_0 = arith.constant 0 : i32
    %c0_i32_1 = arith.constant 0 : i32
    return %c0_i32, %c0_i32_0 : i32, i32
  }
  func.func @transform_3(%arg0: i32) -> (i32, i32) {
    %c0_i32 = arith.constant 0 : i32
    %c0_i32_0 = arith.constant 0 : i32
    %c0_i32_1 = arith.constant 0 : i32
    return %c0_i32, %c0_i32_0 : i32, i32
  }
  func.func @transform_4(%arg0: i32) -> (i32, i32) {
    %c0_i32 = arith.constant 0 : i32
    %c0_i32_0 = arith.constant 0 : i32
    %c0_i32_1 = arith.constant 0 : i32
    return %c0_i32, %c0_i32_0 : i32, i32
  }
  func.func @transform_5(%arg0: i32) -> (i32, i32) {
    %c0_i32 = arith.constant 0 : i32
    %c0_i32_0 = arith.constant 0 : i32
    %c0_i32_1 = arith.constant 0 : i32
    return %c0_i32, %c0_i32_0 : i32, i32
  }
  func.func @transform_6(%arg0: i32) -> (i32, i32, i32) {
    %c0_i32 = arith.constant 0 : i32
    %c0_i32_0 = arith.constant 0 : i32
    %c0_i32_1 = arith.constant 0 : i32
    %c0_i32_2 = arith.constant 0 : i32
    return %c0_i32, %c0_i32_0, %c0_i32_1 : i32, i32, i32
  }
  func.func @transform_7(%arg0: i32) -> (i32, i32, i32, i32) {
    %c0_i32 = arith.constant 0 : i32
    %c0_i32_0 = arith.constant 0 : i32
    %c0_i32_1 = arith.constant 0 : i32
    %c0_i32_2 = arith.constant 0 : i32
    return %arg0, %c0_i32, %c0_i32_0, %c0_i32_1 : i32, i32, i32, i32
  }
}

</mosaic_0001>

<llo_original>
// kernel: tpu_custom_call.1
$region0: #{tpu_custom_call.1}
  #allocation0 [shape = 'u32[]', space=smem, size = 0x4, offset = 0x4, fixed_abs, tag = 'smem constant byte address 0x4 - core index']
  #allocation1 [shape = 'u32[144,128]{1,0:T(1,128)}', space=vmem, size = 0x12000, scoped, tag = 'internal scratch']
  %s0 = inlined_call_operand.vmem [shape: f32[2,8,16], index: 0, kind: input, shape index: {}]
  %s1 = inlined_call_operand.vmem [shape: f32[2,8,16], index: 1, kind: input, shape index: {}]
  %s2 = inlined_call_operand.vmem [shape: f32[16,33], index: 2, kind: input, shape index: {}]
  %s3 = inlined_call_operand.vmem [shape: f32[1,33], index: 3, kind: input, shape index: {}]
  %s4 = inlined_call_operand.vmem [shape: f32[16,33], index: 4, kind: input, shape index: {}]
  %s5 = inlined_call_operand.vmem [shape: f32[1,33], index: 5, kind: input, shape index: {}]
  %s6 = inlined_call_operand.vmem [shape: f32[4,33,33], index: 6, kind: input, shape index: {}]
  %s7 = inlined_call_operand.hbm [shape: f32[2,4,8,8], index: 7, kind: output, shape index: {}]
  %s8 = sld [smem:[#allocation0]]
  $region61: #{tpu_custom_call.1} parent=0
    _
  %s10 = ssub.s32 1, %s8
  %s11 = scalar_select 0, %s10, %s8
  $region1: #{tpu_custom_call.1} parent=0
    #allocation2 [shape = 'u8[32768]{0}', space=vmem, size = 0x8000, scoped, tag = 'output window, operand 0']
    #allocation3 [shape = 's32[2]{0}', space=sflag, size = 0x8, scoped, tag = 'scoped memory for tpu_custom_call.1']
    %12 = vsyncpa [#allocation3], 0
    %s13 = scalar_lea.sflag [#allocation3], 1
    %14 = vsyncpa %s13, 0
    loop: start=0, step=1, limit=4
    $region2: #{tpu_custom_call.1} parent=1 // loop_pre_header
      _
    $region3: #{tpu_custom_call.1} parent=1 // loop_header
      %s16 = sphi 0, %s20
      %p17 = scmp.ge.s32.totalorder %s16, 4
      %s26 = sphi 0, %s28
      %s29 = sphi 0, %s26
      %s30 = sphi 0, %s29
      %s46 = sphi 0, %s30
      %s52 = sphi 0, %s54
      %s55 = sphi 0, %s52
      %s56 = sphi 0, %s55
      %s72 = sphi 0, %s56
      %s76 = sphi 0, %s76
      %s78 = sphi 0, %s76
      %s79 = sphi 0, %s78
      %s93 = sphi 0, %s79
      %s97 = sphi 0, %s97
      %s99 = sphi 0, %s97
      %s100 = sphi 0, %s99
      %s114 = sphi 0, %s100
      %s118 = sphi 0, %s118
      %s120 = sphi 0, %s118
      %s121 = sphi 0, %s120
      %s135 = sphi 0, %s121
      %s139 = sphi 0, %s139
      %s141 = sphi 0, %s139
      %s142 = sphi 0, %s141
      %s156 = sphi 0, %s142
      %s160 = sphi 0, %s160
      %s162 = sphi 0, %s160
      %s163 = sphi 0, %s162
      %s177 = sphi 0, %s163
      %s183 = sphi 0, %s185
      %s186 = sphi 0, %s183
      %s187 = sphi 0, %s186
      %s203 = sphi 0, %s187
    $region4: #{tpu_custom_call.1} parent=1 // loop_header_branch
      %19 = sbr.rel (%p17) target = $region8
    $region5: #{tpu_custom_call.1} parent=1 // loop_body
      %s21 = ssub.s32 %s16, 1
      %s22 = ssub.s32 %s16, 2
      %s23 = sadd.s32 %s16, 1
      %s24 = ssub.s32 %s16, %s23
      %p25 = scmp.eq.s32.totalorder %s24, 0
      %s27 = sadd.s32 %s26, 1
      %s28 = scalar_select %p25, %s26, %s27
      %p31 = pneg %p25
      %p32 = scmp.eq.s32.totalorder %s16, 1
      %p33 = por %p31, %p32
      %p34 = scmp.ne.s32.totalorder %s26, %s29
      %p35 = scmp.eq.s32.totalorder %s16, 0
      %p36 = por %p34, %p35
      %p37 = scmp.ne.s32.totalorder %s26, %s29
      %p38 = scmp.eq.s32.totalorder %s21, 1
      %p39 = por %p37, %p38
      %p40 = scmp.ne.s32.totalorder %s29, %s30
      %p41 = scmp.eq.s32.totalorder %s21, 0
      %p42 = por %p40, %p41
      %p43 = scmp.ne.s32.totalorder %s29, %s30
      %p44 = scmp.eq.s32.totalorder %s22, 1
      %p45 = por %p43, %p44
      %p47 = scmp.ne.s32.totalorder %s30, %s46
      %p48 = scmp.eq.s32.totalorder %s22, 0
      %p49 = por %p47, %p48
      %s50 = ssub.s32 %s16, %s23
      %p51 = scmp.eq.s32.totalorder %s50, 0
      %s53 = sadd.s32 %s52, 1
      %s54 = scalar_select %p51, %s52, %s53
      %p57 = pneg %p51
      %p58 = scmp.eq.s32.totalorder %s16, 1
      %p59 = por %p57, %p58
      %p60 = scmp.ne.s32.totalorder %s52, %s55
      %p61 = scmp.eq.s32.totalorder %s16, 0
      %p62 = por %p60, %p61
      %p63 = scmp.ne.s32.totalorder %s52, %s55
      %p64 = scmp.eq.s32.totalorder %s21, 1
      %p65 = por %p63, %p64
      %p66 = scmp.ne.s32.totalorder %s55, %s56
      %p67 = scmp.eq.s32.totalorder %s21, 0
      %p68 = por %p66, %p67
      %p69 = scmp.ne.s32.totalorder %s55, %s56
      %p70 = scmp.eq.s32.totalorder %s22, 1
      %p71 = por %p69, %p70
      %p73 = scmp.ne.s32.totalorder %s56, %s72
      %p74 = scmp.eq.s32.totalorder %s22, 0
      %p75 = por %p73, %p74
      %s77 = sadd.s32 %s76, 1
      %p80 = scmp.eq.s32.totalorder %s16, 1
      %p81 = scmp.ne.s32.totalorder %s76, %s78
      %p82 = scmp.eq.s32.totalorder %s16, 0
      %p83 = por %p81, %p82
      %p84 = scmp.ne.s32.totalorder %s76, %s78
      %p85 = scmp.eq.s32.totalorder %s21, 1
      %p86 = por %p84, %p85
      %p87 = scmp.ne.s32.totalorder %s78, %s79
      %p88 = scmp.eq.s32.totalorder %s21, 0
      %p89 = por %p87, %p88
      %p90 = scmp.ne.s32.totalorder %s78, %s79
      %p91 = scmp.eq.s32.totalorder %s22, 1
      %p92 = por %p90, %p91
      %p94 = scmp.ne.s32.totalorder %s79, %s93
      %p95 = scmp.eq.s32.totalorder %s22, 0
      %p96 = por %p94, %p95
      %s98 = sadd.s32 %s97, 1
      %p101 = scmp.eq.s32.totalorder %s16, 1
      %p102 = scmp.ne.s32.totalorder %s97, %s99
      %p103 = scmp.eq.s32.totalorder %s16, 0
      %p104 = por %p102, %p103
      %p105 = scmp.ne.s32.totalorder %s97, %s99
      %p106 = scmp.eq.s32.totalorder %s21, 1
      %p107 = por %p105, %p106
      %p108 = scmp.ne.s32.totalorder %s99, %s100
      %p109 = scmp.eq.s32.totalorder %s21, 0
      %p110 = por %p108, %p109
      %p111 = scmp.ne.s32.totalorder %s99, %s100
      %p112 = scmp.eq.s32.totalorder %s22, 1
      %p113 = por %p111, %p112
      %p115 = scmp.ne.s32.totalorder %s100, %s114
      %p116 = scmp.eq.s32.totalorder %s22, 0
      %p117 = por %p115, %p116
      %s119 = sadd.s32 %s118, 1
      %p122 = scmp.eq.s32.totalorder %s16, 1
      %p123 = scmp.ne.s32.totalorder %s118, %s120
      %p124 = scmp.eq.s32.totalorder %s16, 0
      %p125 = por %p123, %p124
      %p126 = scmp.ne.s32.totalorder %s118, %s120
      %p127 = scmp.eq.s32.totalorder %s21, 1
      %p128 = por %p126, %p127
      %p129 = scmp.ne.s32.totalorder %s120, %s121
      %p130 = scmp.eq.s32.totalorder %s21, 0
      %p131 = por %p129, %p130
      %p132 = scmp.ne.s32.totalorder %s120, %s121
      %p133 = scmp.eq.s32.totalorder %s22, 1
      %p134 = por %p132, %p133
      %p136 = scmp.ne.s32.totalorder %s121, %s135
      %p137 = scmp.eq.s32.totalorder %s22, 0
      %p138 = por %p136, %p137
      %s140 = sadd.s32 %s139, 1
      %p143 = scmp.eq.s32.totalorder %s16, 1
      %p144 = scmp.ne.s32.totalorder %s139, %s141
      %p145 = scmp.eq.s32.totalorder %s16, 0
      %p146 = por %p144, %p145
      %p147 = scmp.ne.s32.totalorder %s139, %s141
      %p148 = scmp.eq.s32.totalorder %s21, 1
      %p149 = por %p147, %p148
      %p150 = scmp.ne.s32.totalorder %s141, %s142
      %p151 = scmp.eq.s32.totalorder %s21, 0
      %p152 = por %p150, %p151
      %p153 = scmp.ne.s32.totalorder %s141, %s142
      %p154 = scmp.eq.s32.totalorder %s22, 1
      %p155 = por %p153, %p154
      %p157 = scmp.ne.s32.totalorder %s142, %s156
      %p158 = scmp.eq.s32.totalorder %s22, 0
      %p159 = por %p157, %p158
      %s161 = sadd.s32 %s160, 1
      %p164 = scmp.eq.s32.totalorder %s16, 1
      %p165 = scmp.ne.s32.totalorder %s160, %s162
      %p166 = scmp.eq.s32.totalorder %s16, 0
      %p167 = por %p165, %p166
      %p168 = scmp.ne.s32.totalorder %s160, %s162
      %p169 = scmp.eq.s32.totalorder %s21, 1
      %p170 = por %p168, %p169
      %p171 = scmp.ne.s32.totalorder %s162, %s163
      %p172 = scmp.eq.s32.totalorder %s21, 0
      %p173 = por %p171, %p172
      %p174 = scmp.ne.s32.totalorder %s162, %s163
      %p175 = scmp.eq.s32.totalorder %s22, 1
      %p176 = por %p174, %p175
      %p178 = scmp.ne.s32.totalorder %s163, %s177
      %p179 = scmp.eq.s32.totalorder %s22, 0
      %p180 = por %p178, %p179
      %s181 = ssub.s32 %s16, %s23
      %p182 = scmp.eq.s32.totalorder %s181, 0
      %s184 = sadd.s32 %s183, 1
      %s185 = scalar_select %p182, %s183, %s184
      %p188 = pneg %p182
      %p189 = scmp.eq.s32.totalorder %s16, 1
      %p190 = por %p188, %p189
      %p191 = scmp.ne.s32.totalorder %s183, %s186
      %p192 = scmp.eq.s32.totalorder %s16, 0
      %p193 = por %p191, %p192
      %p194 = scmp.ne.s32.totalorder %s183, %s186
      %p195 = scmp.eq.s32.totalorder %s21, 1
      %p196 = por %p194, %p195
      %p197 = scmp.ne.s32.totalorder %s186, %s187
      %p198 = scmp.eq.s32.totalorder %s21, 0
      %p199 = por %p197, %p198
      %p200 = scmp.ne.s32.totalorder %s186, %s187
      %p201 = scmp.eq.s32.totalorder %s22, 1
      %p202 = por %p200, %p201
      %p204 = scmp.ne.s32.totalorder %s187, %s203
      %p205 = scmp.eq.s32.totalorder %s22, 0
      %p206 = por %p204, %p205
      %p207 = scmp.le.s32.totalorder 1, %s16
      %p208 = scmp.lt.s32.totalorder %s16, 3
      %p209 = pnand %p207, %p208
      %p210 = pneg %p209
      // Predicated region
      $region9: #{tpu_custom_call.1} parent=5 // pred_check
        _
      $region10: #{tpu_custom_call.1} parent=5 // pred_check_branch
        %212 = sbr.rel (%p209) target = $region12
      $region11: #{tpu_custom_call.1} parent=5 // pred_region
        %s213 = ssub.s32 %s16, 1
        // Predicated region
        $region13: #{tpu_custom_call.1} parent=11 // pred_check
          %p214 = pneg %p89
        $region14: #{tpu_custom_call.1} parent=11 // pred_check_branch
          %216 = sbr.rel (%p214) target = $region16
        $region15: #{tpu_custom_call.1} parent=11 // pred_region
          _
        $region16: #{tpu_custom_call.1} parent=11 // pred_fallthru
          _
        // Predicated region
        $region17: #{tpu_custom_call.1} parent=11 // pred_check
          %p217 = pneg %p110
        $region18: #{tpu_custom_call.1} parent=11 // pred_check_branch
          %219 = sbr.rel (%p217) target = $region20
        $region19: #{tpu_custom_call.1} parent=11 // pred_region
          _
        $region20: #{tpu_custom_call.1} parent=11 // pred_fallthru
          _
        // Predicated region
        $region21: #{tpu_custom_call.1} parent=11 // pred_check
          %p220 = pneg %p131
        $region22: #{tpu_custom_call.1} parent=11 // pred_check_branch
          %222 = sbr.rel (%p220) target = $region24
        $region23: #{tpu_custom_call.1} parent=11 // pred_region
          _
        $region24: #{tpu_custom_call.1} parent=11 // pred_fallthru
          _
        // Predicated region
        $region25: #{tpu_custom_call.1} parent=11 // pred_check
          %p223 = pneg %p152
        $region26: #{tpu_custom_call.1} parent=11 // pred_check_branch
          %225 = sbr.rel (%p223) target = $region28
        $region27: #{tpu_custom_call.1} parent=11 // pred_region
          _
        $region28: #{tpu_custom_call.1} parent=11 // pred_fallthru
          _
        // Predicated region
        $region29: #{tpu_custom_call.1} parent=11 // pred_check
          %p226 = pneg %p173
        $region30: #{tpu_custom_call.1} parent=11 // pred_check_branch
          %228 = sbr.rel (%p226) target = $region32
        $region31: #{tpu_custom_call.1} parent=11 // pred_region
          _
        $region32: #{tpu_custom_call.1} parent=11 // pred_fallthru
          _
      $region12: #{tpu_custom_call.1} parent=5 // pred_fallthru
        _
      %p229 = scmp.lt.s32.totalorder %s16, 2
      // Predicated region
      $region33: #{tpu_custom_call.1} parent=5 // pred_check
        %p230 = pneg %p229
      $region34: #{tpu_custom_call.1} parent=5 // pred_check_branch
        %232 = sbr.rel (%p230) target = $region36
      $region35: #{tpu_custom_call.1} parent=5 // pred_region
        // Predicated region
        $region37: #{tpu_custom_call.1} parent=35 // pred_check
          %p233 = pneg %p36
        $region38: #{tpu_custom_call.1} parent=35 // pred_check_branch
          %235 = sbr.rel (%p233) target = $region40
        $region39: #{tpu_custom_call.1} parent=35 // pred_region
          %p236 = scmp.lt.s32.totalorder %s16, 1
          %s237 = scalar_select %p236, %s16, 1
          %s238 = smul.addr %s237, 8
          %s239 = scalar_lea.vmem %s0, %s238
        $region40: #{tpu_custom_call.1} parent=35 // pred_fallthru
          _
        // Predicated region
        $region41: #{tpu_custom_call.1} parent=35 // pred_check
          %p240 = pneg %p62
        $region42: #{tpu_custom_call.1} parent=35 // pred_check_branch
          %242 = sbr.rel (%p240) target = $region44
        $region43: #{tpu_custom_call.1} parent=35 // pred_region
          %p243 = scmp.lt.s32.totalorder %s16, 1
          %s244 = scalar_select %p243, %s16, 1
          %s245 = smul.addr %s244, 8
          %s246 = scalar_lea.vmem %s1, %s245
        $region44: #{tpu_custom_call.1} parent=35 // pred_fallthru
          _
      $region36: #{tpu_custom_call.1} parent=5 // pred_fallthru
        _
      %p247 = scmp.le.s32.totalorder 1, %s16
      %p248 = scmp.lt.s32.totalorder %s16, 3
      %p249 = pnand %p247, %p248
      %p250 = pneg %p249
      // Predicated region
      $region45: #{tpu_custom_call.1} parent=5 // pred_check
        _
      $region46: #{tpu_custom_call.1} parent=5 // pred_check_branch
        %252 = sbr.rel (%p249) target = $region48
      $region47: #{tpu_custom_call.1} parent=5 // pred_region
        %s253 = ssub.s32 %s16, 1
        %p254 = scmp.lt.s32.totalorder %s21, 1
        %s255 = scalar_select %p254, %s21, 1
        %s256 = smul.addr %s255, 8
        %s257 = scalar_lea.vmem %s0, %s256
        %p258 = pneg %p42
        %p259 = pneg %p39
        %p260 = scmp.lt.s32.totalorder %s21, 1
        %s261 = scalar_select %p260, %s21, 1
        %s262 = smul.addr %s261, 8
        %s263 = scalar_lea.vmem %s1, %s262
        %p264 = pneg %p68
        %p265 = pneg %p65
        %p266 = pneg %p89
        %p267 = pneg %p86
        %p268 = pneg %p110
        %p269 = pneg %p107
        %p270 = pneg %p131
        %p271 = pneg %p128
        %p272 = pneg %p152
        %p273 = pneg %p149
        %p274 = pneg %p173
        %p275 = pneg %p170
        %p276 = pneg %p199
        %p277 = pneg %p196
        %s278 = sand.u32 %s186, 1
        %s279 = scalar_lea.sflag [#allocation3], %s278
        %s280 = sand.u32 %s186, 1
        %s281 = smul.addr %s280, 32
        %s282 = scalar_lea.vmem [#allocation2], %s281
        %p283 = scmp.lt.s32.totalorder %s21, 1
        %s284 = scalar_select %p283, %s21, 1
        %s285 = smul.addr %s284, 8
        %s286 = scalar_lea.vmem %s0, %s285
        %p287 = scmp.lt.s32.totalorder %s21, 1
        %s288 = scalar_select %p287, %s21, 1
        %s289 = smul.addr %s288, 8
        %s290 = scalar_lea.vmem %s1, %s289
        %v291 = vld [vmem:[%s286] sm:$0xff]
        %v292 = vld [vmem:[%s290] sm:$0xff]
        %v293 = vld [vmem:[%s2] sm:$0xff]
        %v294 = vld [vmem:[%s2 + $0x8] sm:$0xff]
        %v295 = vld [vmem:[%s3] sm:$0x1]
        %v297 = vlaneseq
        %v298 = vshrl.u32 %v297, 7
        %v299 = vsub.s32 0, %v298
        %v300 = vrot.slane %v295, %v299
        %vm302 = vcmask 130048
        %v304 = vsel %vm302, %v291, 0
        %306 = vmatprep.subr.mxu0 0.0
        %307 = vmatpush1.msra.mxu0 %v293
        %308 = vmatprep.subr.mxu0 0.0
        %309 = vmatpush1.msra.mxu0 %v294
        %310 = vmatprep.subr.mxu0 0.0
        %311 = vmatpush1.msra.mxu0 0.0
        %312 = vmatprep.subr.mxu0 0.0
        %313 = vmatpush1.msra.mxu0 0.0
        %314 = vmatprep.subr.mxu0 0.0
        %315 = vmatpush1.msra.mxu0 0.0
        %316 = vmatprep.subr.mxu0 0.0
        %317 = vmatpush1.msra.mxu0 0.0
        %318 = vmatprep.subr.mxu0 0.0
        %319 = vmatpush1.msra.mxu0 0.0
        %320 = vmatprep.subr.mxu0 0.0
        %321 = vmatpush1.msra.mxu0 0.0
        %322 = vmatprep.subr.mxu0 0.0
        %323 = vmatpush1.msra.mxu0 0.0
        %324 = vmatprep.subr.mxu0 0.0
        %325 = vmatpush1.msra.mxu0 0.0
        %326 = vmatprep.subr.mxu0 0.0
        %327 = vmatpush1.msra.mxu0 0.0
        %328 = vmatprep.subr.mxu0 0.0
        %329 = vmatpush1.msra.mxu0 0.0
        %330 = vmatprep.subr.mxu0 0.0
        %331 = vmatpush1.msra.mxu0 0.0
        %332 = vmatprep.subr.mxu0 0.0
        %333 = vmatpush1.msra.mxu0 0.0
        %334 = vmatprep.subr.mxu0 0.0
        %335 = vmatpush1.msra.mxu0 0.0
        %336 = vmatprep.subr.mxu0 0.0
        %337 = vmatpush1.msra.mxu0 0.0
        %338 = vmatprep.subr.mxu0 0.0
        %339 = vmatpush1.msra.mxu0 0.0
        %340 = vmatprep.subr.mxu0 0.0
        %341 = vmatpush1.msra.mxu0 0.0
        %342 = vmatprep.subr.mxu0 0.0
        %343 = vmatpush1.msra.mxu0 0.0
        %344 = vmatprep.subr.mxu0 0.0
        %345 = vmatpush1.msra.mxu0 0.0
        %346 = vmatprep.subr.mxu0 0.0
        %347 = vmatpush1.msra.mxu0 0.0
        %348 = vmatprep.subr.mxu0 0.0
        %349 = vmatpush1.msra.mxu0 0.0
        %350 = vmatprep.subr.mxu0 0.0
        %351 = vmatpush1.msra.mxu0 0.0
        %352 = vmatprep.subr.mxu0 0.0
        %353 = vmatpush1.msra.mxu0 0.0
        %354 = vmatprep.subr.mxu0 0.0
        %355 = vmatpush1.msra.mxu0 0.0
        %356 = vmatprep.subr.mxu0 0.0
        %357 = vmatpush1.msra.mxu0 0.0
        %358 = vmatprep.subr.mxu0 0.0
        %359 = vmatpush1.msra.mxu0 0.0
        %360 = vmatprep.subr.mxu0 0.0
        %361 = vmatpush1.msra.mxu0 0.0
        %362 = vmatprep.subr.mxu0 0.0
        %363 = vmatpush1.msra.mxu0 0.0
        %364 = vmatprep.subr.mxu0 0.0
        %365 = vmatpush1.msra.mxu0 0.0
        %366 = vmatprep.subr.mxu0 0.0
        %367 = vmatpush1.msra.mxu0 0.0
        %368 = vmatprep.subr.mxu0 0.0
        %369 = vmatpush1.msra.mxu0 0.0
        %370 = vmatprep.mubr.f32.mxu0 0.0
        %371 = vmatmul.mubr.f32.gmra.mrb[0].mxu0 %v304
        %v372 = vpop.f32.mrb[0].mxu0
        %v373 = vadd.f32 %v300, %v372
        %v374 = vpop.f32.mrb[0].mxu0
        %375 = vdwg.mxu0
        %v376 = vmax.f32 %v373, 0.0
        %v377 = vld [vmem:[%s4] sm:$0xff]
        %v378 = vld [vmem:[%s4 + $0x8] sm:$0xff]
        %v379 = vld [vmem:[%s5] sm:$0x1]
        %v381 = vlaneseq
        %v382 = vshrl.u32 %v381, 7
        %v383 = vsub.s32 0, %v382
        %v384 = vrot.slane %v379, %v383
        %v387 = vsel %vm302, %v292, 0
        %389 = vmatprep.subr.mxu0 0.0
        %390 = vmatpush1.msra.mxu0 %v377
        %391 = vmatprep.subr.mxu0 0.0
        %392 = vmatpush1.msra.mxu0 %v378
        %393 = vmatprep.subr.mxu0 0.0
        %394 = vmatpush1.msra.mxu0 0.0
        %395 = vmatprep.subr.mxu0 0.0
        %396 = vmatpush1.msra.mxu0 0.0
        %397 = vmatprep.subr.mxu0 0.0
        %398 = vmatpush1.msra.mxu0 0.0
        %399 = vmatprep.subr.mxu0 0.0
        %400 = vmatpush1.msra.mxu0 0.0
        %401 = vmatprep.subr.mxu0 0.0
        %402 = vmatpush1.msra.mxu0 0.0
        %403 = vmatprep.subr.mxu0 0.0
        %404 = vmatpush1.msra.mxu0 0.0
        %405 = vmatprep.subr.mxu0 0.0
        %406 = vmatpush1.msra.mxu0 0.0
        %407 = vmatprep.subr.mxu0 0.0
        %408 = vmatpush1.msra.mxu0 0.0
        %409 = vmatprep.subr.mxu0 0.0
        %410 = vmatpush1.msra.mxu0 0.0
        %411 = vmatprep.subr.mxu0 0.0
        %412 = vmatpush1.msra.mxu0 0.0
        %413 = vmatprep.subr.mxu0 0.0
        %414 = vmatpush1.msra.mxu0 0.0
        %415 = vmatprep.subr.mxu0 0.0
        %416 = vmatpush1.msra.mxu0 0.0
        %417 = vmatprep.subr.mxu0 0.0
        %418 = vmatpush1.msra.mxu0 0.0
        %419 = vmatprep.subr.mxu0 0.0
        %420 = vmatpush1.msra.mxu0 0.0
        %421 = vmatprep.subr.mxu0 0.0
        %422 = vmatpush1.msra.mxu0 0.0
        %423 = vmatprep.subr.mxu0 0.0
        %424 = vmatpush1.msra.mxu0 0.0
        %425 = vmatprep.subr.mxu0 0.0
        %426 = vmatpush1.msra.mxu0 0.0
        %427 = vmatprep.subr.mxu0 0.0
        %428 = vmatpush1.msra.mxu0 0.0
        %429 = vmatprep.subr.mxu0 0.0
        %430 = vmatpush1.msra.mxu0 0.0
        %431 = vmatprep.subr.mxu0 0.0
        %432 = vmatpush1.msra.mxu0 0.0
        %433 = vmatprep.subr.mxu0 0.0
        %434 = vmatpush1.msra.mxu0 0.0
        %435 = vmatprep.subr.mxu0 0.0
        %436 = vmatpush1.msra.mxu0 0.0
        %437 = vmatprep.subr.mxu0 0.0
        %438 = vmatpush1.msra.mxu0 0.0
        %439 = vmatprep.subr.mxu0 0.0
        %440 = vmatpush1.msra.mxu0 0.0
        %441 = vmatprep.subr.mxu0 0.0
        %442 = vmatpush1.msra.mxu0 0.0
        %443 = vmatprep.subr.mxu0 0.0
        %444 = vmatpush1.msra.mxu0 0.0
        %445 = vmatprep.subr.mxu0 0.0
        %446 = vmatpush1.msra.mxu0 0.0
        %447 = vmatprep.subr.mxu0 0.0
        %448 = vmatpush1.msra.mxu0 0.0
        %449 = vmatprep.subr.mxu0 0.0
        %450 = vmatpush1.msra.mxu0 0.0
        %451 = vmatprep.subr.mxu0 0.0
        %452 = vmatpush1.msra.mxu0 0.0
        %453 = vmatprep.mubr.f32.mxu0 0.0
        %454 = vmatmul.mubr.f32.gmra.mrb[0].mxu0 %v387
        %v455 = vpop.f32.mrb[0].mxu0
        %v456 = vadd.f32 %v384, %v455
        %v457 = vpop.f32.mrb[0].mxu0
        %458 = vdwg.mxu0
        %v459 = vmax.f32 %v456, 0.0
        %v460 = vld [vmem:[%s6] sm:$0xff]
        %v461 = vld [vmem:[%s6 + $0x8] sm:$0xff]
        %v462 = vld [vmem:[%s6 + $0x10] sm:$0xff]
        %v463 = vld [vmem:[%s6 + $0x18] sm:$0xff]
        %v464 = vld [vmem:[%s6 + $0x20] sm:$0x1]
        %vm465 = vcmask 269312
        %v467 = vsel %vm465, %v459, 0
        %vm469 = vcmask 1040384
        %v471 = vsel %vm469, %v464, 0
        %473 = vmatprep.subr.mxu0 0.0
        %474 = vmatpush1.msra.mxu0 %v460
        %475 = vmatprep.subr.mxu0 0.0
        %476 = vmatpush1.msra.mxu0 %v461
        %477 = vmatprep.subr.mxu0 0.0
        %478 = vmatpush1.msra.mxu0 %v462
        %479 = vmatprep.subr.mxu0 0.0
        %480 = vmatpush1.msra.mxu0 %v463
        %481 = vmatprep.subr.mxu0 0.0
        %482 = vmatpush1.msra.mxu0 %v471
        %483 = vmatprep.subr.mxu0 0.0
        %484 = vmatpush1.msra.mxu0 0.0
        %485 = vmatprep.subr.mxu0 0.0
        %486 = vmatpush1.msra.mxu0 0.0
        %487 = vmatprep.subr.mxu0 0.0
        %488 = vmatpush1.msra.mxu0 0.0
        %489 = vmatprep.subr.mxu0 0.0
        %490 = vmatpush1.msra.mxu0 0.0
        %491 = vmatprep.subr.mxu0 0.0
        %492 = vmatpush1.msra.mxu0 0.0
        %493 = vmatprep.subr.mxu0 0.0
        %494 = vmatpush1.msra.mxu0 0.0
        %495 = vmatprep.subr.mxu0 0.0
        %496 = vmatpush1.msra.mxu0 0.0
        %497 = vmatprep.subr.mxu0 0.0
        %498 = vmatpush1.msra.mxu0 0.0
        %499 = vmatprep.subr.mxu0 0.0
        %500 = vmatpush1.msra.mxu0 0.0
        %501 = vmatprep.subr.mxu0 0.0
        %502 = vmatpush1.msra.mxu0 0.0
        %503 = vmatprep.subr.mxu0 0.0
        %504 = vmatpush1.msra.mxu0 0.0
        %505 = vmatprep.subr.mxu0 0.0
        %506 = vmatpush1.msra.mxu0 0.0
        %507 = vmatprep.subr.mxu0 0.0
        %508 = vmatpush1.msra.mxu0 0.0
        %509 = vmatprep.subr.mxu0 0.0
        %510 = vmatpush1.msra.mxu0 0.0
        %511 = vmatprep.subr.mxu0 0.0
        %512 = vmatpush1.msra.mxu0 0.0
        %513 = vmatprep.subr.mxu0 0.0
        %514 = vmatpush1.msra.mxu0 0.0
        %515 = vmatprep.subr.mxu0 0.0
        %516 = vmatpush1.msra.mxu0 0.0
        %517 = vmatprep.subr.mxu0 0.0
        %518 = vmatpush1.msra.mxu0 0.0
        %519 = vmatprep.subr.mxu0 0.0
        %520 = vmatpush1.msra.mxu0 0.0
        %521 = vmatprep.subr.mxu0 0.0
        %522 = vmatpush1.msra.mxu0 0.0
        %523 = vmatprep.subr.mxu0 0.0
        %524 = vmatpush1.msra.mxu0 0.0
        %525 = vmatprep.subr.mxu0 0.0
        %526 = vmatpush1.msra.mxu0 0.0
        %527 = vmatprep.subr.mxu0 0.0
        %528 = vmatpush1.msra.mxu0 0.0
        %529 = vmatprep.subr.mxu0 0.0
        %530 = vmatpush1.msra.mxu0 0.0
        %531 = vmatprep.subr.mxu0 0.0
        %532 = vmatpush1.msra.mxu0 0.0
        %533 = vmatprep.subr.mxu0 0.0
        %534 = vmatpush1.msra.mxu0 0.0
        %535 = vmatprep.subr.mxu0 0.0
        %536 = vmatpush1.msra.mxu0 0.0
        %537 = vmatprep.mubr.f32.mxu0 0.0
        %538 = vmatmul.mubr.f32.gmra.mrb[0].mxu0 %v467
        %v539 = vpop.f32.mrb[0].mxu0
        %v540 = vadd.f32 0.0, %v539
        %v541 = vpop.f32.mrb[0].mxu0
        %542 = vdwg.mxu0
        %v544 = vsel %vm465, %v540, 0
        %v547 = vsel %vm465, %v376, 0
        %549 = vmatprep.subr.mxu0 0.0
        %550 = vmatpush1.xpose.msra.mxu0 %v547
        %551 = vmatprep.subr.mxu0 0.0
        %552 = vmatpush1.xpose.msra.mxu0 0.0
        %553 = vmatprep.subr.mxu0 0.0
        %554 = vmatpush1.xpose.msra.mxu0 0.0
        %555 = vmatprep.subr.mxu0 0.0
        %556 = vmatpush1.xpose.msra.mxu0 0.0
        %557 = vmatprep.subr.mxu0 0.0
        %558 = vmatpush1.xpose.msra.mxu0 0.0
        %559 = vmatprep.subr.mxu0 0.0
        %560 = vmatpush1.xpose.msra.mxu0 0.0
        %561 = vmatprep.subr.mxu0 0.0
        %562 = vmatpush1.xpose.msra.mxu0 0.0
        %563 = vmatprep.subr.mxu0 0.0
        %564 = vmatpush1.xpose.msra.mxu0 0.0
        %565 = vmatprep.subr.mxu0 0.0
        %566 = vmatpush1.xpose.msra.mxu0 0.0
        %567 = vmatprep.subr.mxu0 0.0
        %568 = vmatpush1.xpose.msra.mxu0 0.0
        %569 = vmatprep.subr.mxu0 0.0
        %570 = vmatpush1.xpose.msra.mxu0 0.0
        %571 = vmatprep.subr.mxu0 0.0
        %572 = vmatpush1.xpose.msra.mxu0 0.0
        %573 = vmatprep.subr.mxu0 0.0
        %574 = vmatpush1.xpose.msra.mxu0 0.0
        %575 = vmatprep.subr.mxu0 0.0
        %576 = vmatpush1.xpose.msra.mxu0 0.0
        %577 = vmatprep.subr.mxu0 0.0
        %578 = vmatpush1.xpose.msra.mxu0 0.0
        %579 = vmatprep.subr.mxu0 0.0
        %580 = vmatpush1.xpose.msra.mxu0 0.0
        %581 = vmatprep.subr.mxu0 0.0
        %582 = vmatpush1.xpose.msra.mxu0 0.0
        %583 = vmatprep.subr.mxu0 0.0
        %584 = vmatpush1.xpose.msra.mxu0 0.0
        %585 = vmatprep.subr.mxu0 0.0
        %586 = vmatpush1.xpose.msra.mxu0 0.0
        %587 = vmatprep.subr.mxu0 0.0
        %588 = vmatpush1.xpose.msra.mxu0 0.0
        %589 = vmatprep.subr.mxu0 0.0
        %590 = vmatpush1.xpose.msra.mxu0 0.0
        %591 = vmatprep.subr.mxu0 0.0
        %592 = vmatpush1.xpose.msra.mxu0 0.0
        %593 = vmatprep.subr.mxu0 0.0
        %594 = vmatpush1.xpose.msra.mxu0 0.0
        %595 = vmatprep.subr.mxu0 0.0
        %596 = vmatpush1.xpose.msra.mxu0 0.0
        %597 = vmatprep.subr.mxu0 0.0
        %598 = vmatpush1.xpose.msra.mxu0 0.0
        %599 = vmatprep.subr.mxu0 0.0
        %600 = vmatpush1.xpose.msra.mxu0 0.0
        %601 = vmatprep.subr.mxu0 0.0
        %602 = vmatpush1.xpose.msra.mxu0 0.0
        %603 = vmatprep.subr.mxu0 0.0
        %604 = vmatpush1.xpose.msra.mxu0 0.0
        %605 = vmatprep.subr.mxu0 0.0
        %606 = vmatpush1.xpose.msra.mxu0 0.0
        %607 = vmatprep.subr.mxu0 0.0
        %608 = vmatpush1.xpose.msra.mxu0 0.0
        %609 = vmatprep.subr.mxu0 0.0
        %610 = vmatpush1.xpose.msra.mxu0 0.0
        %611 = vmatprep.subr.mxu0 0.0
        %612 = vmatpush1.xpose.msra.mxu0 0.0
        %613 = vmatprep.mubr.f32.mxu0 0.0
        %614 = vmatmul.mubr.f32.gmra.mrb[0].mxu0 %v544
        %v615 = vpop.f32.mrb[0].mxu0
        %v616 = vadd.f32 0.0, %v615
        %v617 = vpop.f32.mrb[0].mxu0
        %618 = vdwg.mxu0
        %vm619 = vcmask 64512
        %620 = vst.msk [vmem:[%s282] sm:$0xff] %vm619, %v616
        %s621 = scalar_lea.vmem %s6, 40
        %v622 = vld [vmem:[%s621] sm:$0xff]
        %v623 = vld [vmem:[%s621 + $0x8] sm:$0xff]
        %v624 = vld [vmem:[%s621 + $0x10] sm:$0xff]
        %v625 = vld [vmem:[%s621 + $0x18] sm:$0xff]
        %v626 = vld [vmem:[%s621 + $0x20] sm:$0x1]
        %v628 = vsel %vm469, %v626, 0
        %630 = vmatprep.subr.mxu0 0.0
        %631 = vmatpush1.msra.mxu0 %v622
        %632 = vmatprep.subr.mxu0 0.0
        %633 = vmatpush1.msra.mxu0 %v623
        %634 = vmatprep.subr.mxu0 0.0
        %635 = vmatpush1.msra.mxu0 %v624
        %636 = vmatprep.subr.mxu0 0.0
        %637 = vmatpush1.msra.mxu0 %v625
        %638 = vmatprep.subr.mxu0 0.0
        %639 = vmatpush1.msra.mxu0 %v628
        %640 = vmatprep.subr.mxu0 0.0
        %641 = vmatpush1.msra.mxu0 0.0
        %642 = vmatprep.subr.mxu0 0.0
        %643 = vmatpush1.msra.mxu0 0.0
        %644 = vmatprep.subr.mxu0 0.0
        %645 = vmatpush1.msra.mxu0 0.0
        %646 = vmatprep.subr.mxu0 0.0
        %647 = vmatpush1.msra.mxu0 0.0
        %648 = vmatprep.subr.mxu0 0.0
        %649 = vmatpush1.msra.mxu0 0.0
        %650 = vmatprep.subr.mxu0 0.0
        %651 = vmatpush1.msra.mxu0 0.0
        %652 = vmatprep.subr.mxu0 0.0
        %653 = vmatpush1.msra.mxu0 0.0
        %654 = vmatprep.subr.mxu0 0.0
        %655 = vmatpush1.msra.mxu0 0.0
        %656 = vmatprep.subr.mxu0 0.0
        %657 = vmatpush1.msra.mxu0 0.0
        %658 = vmatprep.subr.mxu0 0.0
        %659 = vmatpush1.msra.mxu0 0.0
        %660 = vmatprep.subr.mxu0 0.0
        %661 = vmatpush1.msra.mxu0 0.0
        %662 = vmatprep.subr.mxu0 0.0
        %663 = vmatpush1.msra.mxu0 0.0
        %664 = vmatprep.subr.mxu0 0.0
        %665 = vmatpush1.msra.mxu0 0.0
        %666 = vmatprep.subr.mxu0 0.0
        %667 = vmatpush1.msra.mxu0 0.0
        %668 = vmatprep.subr.mxu0 0.0
        %669 = vmatpush1.msra.mxu0 0.0
        %670 = vmatprep.subr.mxu0 0.0
        %671 = vmatpush1.msra.mxu0 0.0
        %672 = vmatprep.subr.mxu0 0.0
        %673 = vmatpush1.msra.mxu0 0.0
        %674 = vmatprep.subr.mxu0 0.0
        %675 = vmatpush1.msra.mxu0 0.0
        %676 = vmatprep.subr.mxu0 0.0
        %677 = vmatpush1.msra.mxu0 0.0
        %678 = vmatprep.subr.mxu0 0.0
        %679 = vmatpush1.msra.mxu0 0.0
        %680 = vmatprep.subr.mxu0 0.0
        %681 = vmatpush1.msra.mxu0 0.0
        %682 = vmatprep.subr.mxu0 0.0
        %683 = vmatpush1.msra.mxu0 0.0
        %684 = vmatprep.subr.mxu0 0.0
        %685 = vmatpush1.msra.mxu0 0.0
        %686 = vmatprep.subr.mxu0 0.0
        %687 = vmatpush1.msra.mxu0 0.0
        %688 = vmatprep.subr.mxu0 0.0
        %689 = vmatpush1.msra.mxu0 0.0
        %690 = vmatprep.subr.mxu0 0.0
        %691 = vmatpush1.msra.mxu0 0.0
        %692 = vmatprep.subr.mxu0 0.0
        %693 = vmatpush1.msra.mxu0 0.0
        %694 = vmatprep.mubr.f32.mxu0 0.0
        %695 = vmatmul.mubr.f32.gmra.mrb[0].mxu0 %v467
        %v696 = vpop.f32.mrb[0].mxu0
        %v697 = vadd.f32 0.0, %v696
        %v698 = vpop.f32.mrb[0].mxu0
        %699 = vdwg.mxu0
        %v701 = vsel %vm465, %v697, 0
        %703 = vmatprep.subr.mxu0 0.0
        %704 = vmatpush1.xpose.msra.mxu0 %v547
        %705 = vmatprep.subr.mxu0 0.0
        %706 = vmatpush1.xpose.msra.mxu0 0.0
        %707 = vmatprep.subr.mxu0 0.0
        %708 = vmatpush1.xpose.msra.mxu0 0.0
        %709 = vmatprep.subr.mxu0 0.0
        %710 = vmatpush1.xpose.msra.mxu0 0.0
        %711 = vmatprep.subr.mxu0 0.0
        %712 = vmatpush1.xpose.msra.mxu0 0.0
        %713 = vmatprep.subr.mxu0 0.0
        %714 = vmatpush1.xpose.msra.mxu0 0.0
        %715 = vmatprep.subr.mxu0 0.0
        %716 = vmatpush1.xpose.msra.mxu0 0.0
        %717 = vmatprep.subr.mxu0 0.0
        %718 = vmatpush1.xpose.msra.mxu0 0.0
        %719 = vmatprep.subr.mxu0 0.0
        %720 = vmatpush1.xpose.msra.mxu0 0.0
        %721 = vmatprep.subr.mxu0 0.0
        %722 = vmatpush1.xpose.msra.mxu0 0.0
        %723 = vmatprep.subr.mxu0 0.0
        %724 = vmatpush1.xpose.msra.mxu0 0.0
        %725 = vmatprep.subr.mxu0 0.0
        %726 = vmatpush1.xpose.msra.mxu0 0.0
        %727 = vmatprep.subr.mxu0 0.0
        %728 = vmatpush1.xpose.msra.mxu0 0.0
        %729 = vmatprep.subr.mxu0 0.0
        %730 = vmatpush1.xpose.msra.mxu0 0.0
        %731 = vmatprep.subr.mxu0 0.0
        %732 = vmatpush1.xpose.msra.mxu0 0.0
        %733 = vmatprep.subr.mxu0 0.0
        %734 = vmatpush1.xpose.msra.mxu0 0.0
        %735 = vmatprep.subr.mxu0 0.0
        %736 = vmatpush1.xpose.msra.mxu0 0.0
        %737 = vmatprep.subr.mxu0 0.0
        %738 = vmatpush1.xpose.msra.mxu0 0.0
        %739 = vmatprep.subr.mxu0 0.0
        %740 = vmatpush1.xpose.msra.mxu0 0.0
        %741 = vmatprep.subr.mxu0 0.0
        %742 = vmatpush1.xpose.msra.mxu0 0.0
        %743 = vmatprep.subr.mxu0 0.0
        %744 = vmatpush1.xpose.msra.mxu0 0.0
        %745 = vmatprep.subr.mxu0 0.0
        %746 = vmatpush1.xpose.msra.mxu0 0.0
        %747 = vmatprep.subr.mxu0 0.0
        %748 = vmatpush1.xpose.msra.mxu0 0.0
        %749 = vmatprep.subr.mxu0 0.0
        %750 = vmatpush1.xpose.msra.mxu0 0.0
        %751 = vmatprep.subr.mxu0 0.0
        %752 = vmatpush1.xpose.msra.mxu0 0.0
        %753 = vmatprep.subr.mxu0 0.0
        %754 = vmatpush1.xpose.msra.mxu0 0.0
        %755 = vmatprep.subr.mxu0 0.0
        %756 = vmatpush1.xpose.msra.mxu0 0.0
        %757 = vmatprep.subr.mxu0 0.0
        %758 = vmatpush1.xpose.msra.mxu0 0.0
        %759 = vmatprep.subr.mxu0 0.0
        %760 = vmatpush1.xpose.msra.mxu0 0.0
        %761 = vmatprep.subr.mxu0 0.0
        %762 = vmatpush1.xpose.msra.mxu0 0.0
        %763 = vmatprep.subr.mxu0 0.0
        %764 = vmatpush1.xpose.msra.mxu0 0.0
        %765 = vmatprep.subr.mxu0 0.0
        %766 = vmatpush1.xpose.msra.mxu0 0.0
        %767 = vmatprep.mubr.f32.mxu0 0.0
        %768 = vmatmul.mubr.f32.gmra.mrb[0].mxu0 %v701
        %v769 = vpop.f32.mrb[0].mxu0
        %v770 = vadd.f32 0.0, %v769
        %v771 = vpop.f32.mrb[0].mxu0
        %772 = vdwg.mxu0
        %s773 = scalar_lea.vmem %s282, 8 [#allocation2]
        %774 = vst.msk [vmem:[%s773] sm:$0xff] %vm619, %v770
        %s775 = scalar_lea.vmem %s6, 80
        %v776 = vld [vmem:[%s775] sm:$0xff]
        %v777 = vld [vmem:[%s775 + $0x8] sm:$0xff]
        %v778 = vld [vmem:[%s775 + $0x10] sm:$0xff]
        %v779 = vld [vmem:[%s775 + $0x18] sm:$0xff]
        %v780 = vld [vmem:[%s775 + $0x20] sm:$0x1]
        %v782 = vsel %vm469, %v780, 0
        %784 = vmatprep.subr.mxu0 0.0
        %785 = vmatpush1.msra.mxu0 %v776
        %786 = vmatprep.subr.mxu0 0.0
        %787 = vmatpush1.msra.mxu0 %v777
        %788 = vmatprep.subr.mxu0 0.0
        %789 = vmatpush1.msra.mxu0 %v778
        %790 = vmatprep.subr.mxu0 0.0
        %791 = vmatpush1.msra.mxu0 %v779
        %792 = vmatprep.subr.mxu0 0.0
        %793 = vmatpush1.msra.mxu0 %v782
        %794 = vmatprep.subr.mxu0 0.0
        %795 = vmatpush1.msra.mxu0 0.0
        %796 = vmatprep.subr.mxu0 0.0
        %797 = vmatpush1.msra.mxu0 0.0
        %798 = vmatprep.subr.mxu0 0.0
        %799 = vmatpush1.msra.mxu0 0.0
        %800 = vmatprep.subr.mxu0 0.0
        %801 = vmatpush1.msra.mxu0 0.0
        %802 = vmatprep.subr.mxu0 0.0
        %803 = vmatpush1.msra.mxu0 0.0
        %804 = vmatprep.subr.mxu0 0.0
        %805 = vmatpush1.msra.mxu0 0.0
        %806 = vmatprep.subr.mxu0 0.0
        %807 = vmatpush1.msra.mxu0 0.0
        %808 = vmatprep.subr.mxu0 0.0
        %809 = vmatpush1.msra.mxu0 0.0
        %810 = vmatprep.subr.mxu0 0.0
        %811 = vmatpush1.msra.mxu0 0.0
        %812 = vmatprep.subr.mxu0 0.0
        %813 = vmatpush1.msra.mxu0 0.0
        %814 = vmatprep.subr.mxu0 0.0
        %815 = vmatpush1.msra.mxu0 0.0
        %816 = vmatprep.subr.mxu0 0.0
        %817 = vmatpush1.msra.mxu0 0.0
        %818 = vmatprep.subr.mxu0 0.0
        %819 = vmatpush1.msra.mxu0 0.0
        %820 = vmatprep.subr.mxu0 0.0
        %821 = vmatpush1.msra.mxu0 0.0
        %822 = vmatprep.subr.mxu0 0.0
        %823 = vmatpush1.msra.mxu0 0.0
        %824 = vmatprep.subr.mxu0 0.0
        %825 = vmatpush1.msra.mxu0 0.0
        %826 = vmatprep.subr.mxu0 0.0
        %827 = vmatpush1.msra.mxu0 0.0
        %828 = vmatprep.subr.mxu0 0.0
        %829 = vmatpush1.msra.mxu0 0.0
        %830 = vmatprep.subr.mxu0 0.0
        %831 = vmatpush1.msra.mxu0 0.0
        %832 = vmatprep.subr.mxu0 0.0
        %833 = vmatpush1.msra.mxu0 0.0
        %834 = vmatprep.subr.mxu0 0.0
        %835 = vmatpush1.msra.mxu0 0.0
        %836 = vmatprep.subr.mxu0 0.0
        %837 = vmatpush1.msra.mxu0 0.0
        %838 = vmatprep.subr.mxu0 0.0
        %839 = vmatpush1.msra.mxu0 0.0
        %840 = vmatprep.subr.mxu0 0.0
        %841 = vmatpush1.msra.mxu0 0.0
        %842 = vmatprep.subr.mxu0 0.0
        %843 = vmatpush1.msra.mxu0 0.0
        %844 = vmatprep.subr.mxu0 0.0
        %845 = vmatpush1.msra.mxu0 0.0
        %846 = vmatprep.subr.mxu0 0.0
        %847 = vmatpush1.msra.mxu0 0.0
        %848 = vmatprep.mubr.f32.mxu0 0.0
        %849 = vmatmul.mubr.f32.gmra.mrb[0].mxu0 %v467
        %v850 = vpop.f32.mrb[0].mxu0
        %v851 = vadd.f32 0.0, %v850
        %v852 = vpop.f32.mrb[0].mxu0
        %853 = vdwg.mxu0
        %v855 = vsel %vm465, %v851, 0
        %857 = vmatprep.subr.mxu0 0.0
        %858 = vmatpush1.xpose.msra.mxu0 %v547
        %859 = vmatprep.subr.mxu0 0.0
        %860 = vmatpush1.xpose.msra.mxu0 0.0
        %861 = vmatprep.subr.mxu0 0.0
        %862 = vmatpush1.xpose.msra.mxu0 0.0
        %863 = vmatprep.subr.mxu0 0.0
        %864 = vmatpush1.xpose.msra.mxu0 0.0
        %865 = vmatprep.subr.mxu0 0.0
        %866 = vmatpush1.xpose.msra.mxu0 0.0
        %867 = vmatprep.subr.mxu0 0.0
        %868 = vmatpush1.xpose.msra.mxu0 0.0
        %869 = vmatprep.subr.mxu0 0.0
        %870 = vmatpush1.xpose.msra.mxu0 0.0
        %871 = vmatprep.subr.mxu0 0.0
        %872 = vmatpush1.xpose.msra.mxu0 0.0
        %873 = vmatprep.subr.mxu0 0.0
        %874 = vmatpush1.xpose.msra.mxu0 0.0
        %875 = vmatprep.subr.mxu0 0.0
        %876 = vmatpush1.xpose.msra.mxu0 0.0
        %877 = vmatprep.subr.mxu0 0.0
        %878 = vmatpush1.xpose.msra.mxu0 0.0
        %879 = vmatprep.subr.mxu0 0.0
        %880 = vmatpush1.xpose.msra.mxu0 0.0
        %881 = vmatprep.subr.mxu0 0.0
        %882 = vmatpush1.xpose.msra.mxu0 0.0
        %883 = vmatprep.subr.mxu0 0.0
        %884 = vmatpush1.xpose.msra.mxu0 0.0
        %885 = vmatprep.subr.mxu0 0.0
        %886 = vmatpush1.xpose.msra.mxu0 0.0
        %887 = vmatprep.subr.mxu0 0.0
        %888 = vmatpush1.xpose.msra.mxu0 0.0
        %889 = vmatprep.subr.mxu0 0.0
        %890 = vmatpush1.xpose.msra.mxu0 0.0
        %891 = vmatprep.subr.mxu0 0.0
        %892 = vmatpush1.xpose.msra.mxu0 0.0
        %893 = vmatprep.subr.mxu0 0.0
        %894 = vmatpush1.xpose.msra.mxu0 0.0
        %895 = vmatprep.subr.mxu0 0.0
        %896 = vmatpush1.xpose.msra.mxu0 0.0
        %897 = vmatprep.subr.mxu0 0.0
        %898 = vmatpush1.xpose.msra.mxu0 0.0
        %899 = vmatprep.subr.mxu0 0.0
        %900 = vmatpush1.xpose.msra.mxu0 0.0
        %901 = vmatprep.subr.mxu0 0.0
        %902 = vmatpush1.xpose.msra.mxu0 0.0
        %903 = vmatprep.subr.mxu0 0.0
        %904 = vmatpush1.xpose.msra.mxu0 0.0
        %905 = vmatprep.subr.mxu0 0.0
        %906 = vmatpush1.xpose.msra.mxu0 0.0
        %907 = vmatprep.subr.mxu0 0.0
        %908 = vmatpush1.xpose.msra.mxu0 0.0
        %909 = vmatprep.subr.mxu0 0.0
        %910 = vmatpush1.xpose.msra.mxu0 0.0
        %911 = vmatprep.subr.mxu0 0.0
        %912 = vmatpush1.xpose.msra.mxu0 0.0
        %913 = vmatprep.subr.mxu0 0.0
        %914 = vmatpush1.xpose.msra.mxu0 0.0
        %915 = vmatprep.subr.mxu0 0.0
        %916 = vmatpush1.xpose.msra.mxu0 0.0
        %917 = vmatprep.subr.mxu0 0.0
        %918 = vmatpush1.xpose.msra.mxu0 0.0
        %919 = vmatprep.subr.mxu0 0.0
        %920 = vmatpush1.xpose.msra.mxu0 0.0
        %921 = vmatprep.mubr.f32.mxu0 0.0
        %922 = vmatmul.mubr.f32.gmra.mrb[0].mxu0 %v855
        %v923 = vpop.f32.mrb[0].mxu0
        %v924 = vadd.f32 0.0, %v923
        %v925 = vpop.f32.mrb[0].mxu0
        %926 = vdwg.mxu0
        %s927 = scalar_lea.vmem %s282, 16 [#allocation2]
        %928 = vst.msk [vmem:[%s927] sm:$0xff] %vm619, %v924
        %s929 = scalar_lea.vmem %s6, 120
        %v930 = vld [vmem:[%s929] sm:$0xff]
        %v931 = vld [vmem:[%s929 + $0x8] sm:$0xff]
        %v932 = vld [vmem:[%s929 + $0x10] sm:$0xff]
        %v933 = vld [vmem:[%s929 + $0x18] sm:$0xff]
        %v934 = vld [vmem:[%s929 + $0x20] sm:$0x1]
        %v936 = vsel %vm469, %v934, 0
        %938 = vmatprep.subr.mxu0 0.0
        %939 = vmatpush1.msra.mxu0 %v930
        %940 = vmatprep.subr.mxu0 0.0
        %941 = vmatpush1.msra.mxu0 %v931
        %942 = vmatprep.subr.mxu0 0.0
        %943 = vmatpush1.msra.mxu0 %v932
        %944 = vmatprep.subr.mxu0 0.0
        %945 = vmatpush1.msra.mxu0 %v933
        %946 = vmatprep.subr.mxu0 0.0
        %947 = vmatpush1.msra.mxu0 %v936
        %948 = vmatprep.subr.mxu0 0.0
        %949 = vmatpush1.msra.mxu0 0.0
        %950 = vmatprep.subr.mxu0 0.0
        %951 = vmatpush1.msra.mxu0 0.0
        %952 = vmatprep.subr.mxu0 0.0
        %953 = vmatpush1.msra.mxu0 0.0
        %954 = vmatprep.subr.mxu0 0.0
        %955 = vmatpush1.msra.mxu0 0.0
        %956 = vmatprep.subr.mxu0 0.0
        %957 = vmatpush1.msra.mxu0 0.0
        %958 = vmatprep.subr.mxu0 0.0
        %959 = vmatpush1.msra.mxu0 0.0
        %960 = vmatprep.subr.mxu0 0.0
        %961 = vmatpush1.msra.mxu0 0.0
        %962 = vmatprep.subr.mxu0 0.0
        %963 = vmatpush1.msra.mxu0 0.0
        %964 = vmatprep.subr.mxu0 0.0
        %965 = vmatpush1.msra.mxu0 0.0
        %966 = vmatprep.subr.mxu0 0.0
        %967 = vmatpush1.msra.mxu0 0.0
        %968 = vmatprep.subr.mxu0 0.0
        %969 = vmatpush1.msra.mxu0 0.0
        %970 = vmatprep.subr.mxu0 0.0
        %971 = vmatpush1.msra.mxu0 0.0
        %972 = vmatprep.subr.mxu0 0.0
        %973 = vmatpush1.msra.mxu0 0.0
        %974 = vmatprep.subr.mxu0 0.0
        %975 = vmatpush1.msra.mxu0 0.0
        %976 = vmatprep.subr.mxu0 0.0
        %977 = vmatpush1.msra.mxu0 0.0
        %978 = vmatprep.subr.mxu0 0.0
        %979 = vmatpush1.msra.mxu0 0.0
        %980 = vmatprep.subr.mxu0 0.0
        %981 = vmatpush1.msra.mxu0 0.0
        %982 = vmatprep.subr.mxu0 0.0
        %983 = vmatpush1.msra.mxu0 0.0
        %984 = vmatprep.subr.mxu0 0.0
        %985 = vmatpush1.msra.mxu0 0.0
        %986 = vmatprep.subr.mxu0 0.0
        %987 = vmatpush1.msra.mxu0 0.0
        %988 = vmatprep.subr.mxu0 0.0
        %989 = vmatpush1.msra.mxu0 0.0
        %990 = vmatprep.subr.mxu0 0.0
        %991 = vmatpush1.msra.mxu0 0.0
        %992 = vmatprep.subr.mxu0 0.0
        %993 = vmatpush1.msra.mxu0 0.0
        %994 = vmatprep.subr.mxu0 0.0
        %995 = vmatpush1.msra.mxu0 0.0
        %996 = vmatprep.subr.mxu0 0.0
        %997 = vmatpush1.msra.mxu0 0.0
        %998 = vmatprep.subr.mxu0 0.0
        %999 = vmatpush1.msra.mxu0 0.0
        %1000 = vmatprep.subr.mxu0 0.0
        %1001 = vmatpush1.msra.mxu0 0.0
        %1002 = vmatprep.mubr.f32.mxu0 0.0
        %1003 = vmatmul.mubr.f32.gmra.mrb[0].mxu0 %v467
        %v1004 = vpop.f32.mrb[0].mxu0
        %v1005 = vadd.f32 0.0, %v1004
        %v1006 = vpop.f32.mrb[0].mxu0
        %1007 = vdwg.mxu0
        %v1009 = vsel %vm465, %v1005, 0
        %1011 = vmatprep.subr.mxu0 0.0
        %1012 = vmatpush1.xpose.msra.mxu0 %v547
        %1013 = vmatprep.subr.mxu0 0.0
        %1014 = vmatpush1.xpose.msra.mxu0 0.0
        %1015 = vmatprep.subr.mxu0 0.0
        %1016 = vmatpush1.xpose.msra.mxu0 0.0
        %1017 = vmatprep.subr.mxu0 0.0
        %1018 = vmatpush1.xpose.msra.mxu0 0.0
        %1019 = vmatprep.subr.mxu0 0.0
        %1020 = vmatpush1.xpose.msra.mxu0 0.0
        %1021 = vmatprep.subr.mxu0 0.0
        %1022 = vmatpush1.xpose.msra.mxu0 0.0
        %1023 = vmatprep.subr.mxu0 0.0
        %1024 = vmatpush1.xpose.msra.mxu0 0.0
        %1025 = vmatprep.subr.mxu0 0.0
        %1026 = vmatpush1.xpose.msra.mxu0 0.0
        %1027 = vmatprep.subr.mxu0 0.0
        %1028 = vmatpush1.xpose.msra.mxu0 0.0
        %1029 = vmatprep.subr.mxu0 0.0
        %1030 = vmatpush1.xpose.msra.mxu0 0.0
        %1031 = vmatprep.subr.mxu0 0.0
        %1032 = vmatpush1.xpose.msra.mxu0 0.0
        %1033 = vmatprep.subr.mxu0 0.0
        %1034 = vmatpush1.xpose.msra.mxu0 0.0
        %1035 = vmatprep.subr.mxu0 0.0
        %1036 = vmatpush1.xpose.msra.mxu0 0.0
        %1037 = vmatprep.subr.mxu0 0.0
        %1038 = vmatpush1.xpose.msra.mxu0 0.0
        %1039 = vmatprep.subr.mxu0 0.0
        %1040 = vmatpush1.xpose.msra.mxu0 0.0
        %1041 = vmatprep.subr.mxu0 0.0
        %1042 = vmatpush1.xpose.msra.mxu0 0.0
        %1043 = vmatprep.subr.mxu0 0.0
        %1044 = vmatpush1.xpose.msra.mxu0 0.0
        %1045 = vmatprep.subr.mxu0 0.0
        %1046 = vmatpush1.xpose.msra.mxu0 0.0
        %1047 = vmatprep.subr.mxu0 0.0
        %1048 = vmatpush1.xpose.msra.mxu0 0.0
        %1049 = vmatprep.subr.mxu0 0.0
        %1050 = vmatpush1.xpose.msra.mxu0 0.0
        %1051 = vmatprep.subr.mxu0 0.0
        %1052 = vmatpush1.xpose.msra.mxu0 0.0
        %1053 = vmatprep.subr.mxu0 0.0
        %1054 = vmatpush1.xpose.msra.mxu0 0.0
        %1055 = vmatprep.subr.mxu0 0.0
        %1056 = vmatpush1.xpose.msra.mxu0 0.0
        %1057 = vmatprep.subr.mxu0 0.0
        %1058 = vmatpush1.xpose.msra.mxu0 0.0
        %1059 = vmatprep.subr.mxu0 0.0
        %1060 = vmatpush1.xpose.msra.mxu0 0.0
        %1061 = vmatprep.subr.mxu0 0.0
        %1062 = vmatpush1.xpose.msra.mxu0 0.0
        %1063 = vmatprep.subr.mxu0 0.0
        %1064 = vmatpush1.xpose.msra.mxu0 0.0
        %1065 = vmatprep.subr.mxu0 0.0
        %1066 = vmatpush1.xpose.msra.mxu0 0.0
        %1067 = vmatprep.subr.mxu0 0.0
        %1068 = vmatpush1.xpose.msra.mxu0 0.0
        %1069 = vmatprep.subr.mxu0 0.0
        %1070 = vmatpush1.xpose.msra.mxu0 0.0
        %1071 = vmatprep.subr.mxu0 0.0
        %1072 = vmatpush1.xpose.msra.mxu0 0.0
        %1073 = vmatprep.subr.mxu0 0.0
        %1074 = vmatpush1.xpose.msra.mxu0 0.0
        %1075 = vmatprep.mubr.f32.mxu0 0.0
        %1076 = vmatmul.mubr.f32.gmra.mrb[0].mxu0 %v1009
        %v1077 = vpop.f32.mrb[0].mxu0
        %v1078 = vadd.f32 0.0, %v1077
        %v1079 = vpop.f32.mrb[0].mxu0
        %1080 = vdwg.mxu0
        %s1081 = scalar_lea.vmem %s282, 24 [#allocation2]
        %1082 = vst.msk [vmem:[%s1081] sm:$0xff] %vm619, %v1078
        %s1083 = sand.u32 %s186, 1
        %s1084 = scalar_lea.sflag [#allocation3], %s1083
        %s1085 = sand.u32 %s186, 1
        %s1086 = smul.addr %s1085, 32
        %s1087 = scalar_lea.vmem [#allocation2], %s1086
        // Predicated region
        $region49: #{tpu_custom_call.1} parent=47 // pred_check
          %p1088 = pneg %p196
        $region50: #{tpu_custom_call.1} parent=47 // pred_check_branch
          %1090 = sbr.rel (%p1088) target = $region52
        $region51: #{tpu_custom_call.1} parent=47 // pred_region
          %s1092 = ssub.s32 512, 512
          %1093 = vsyncadd %s1084, %s1092
          %s1094 = smul.addr %s21, 4
          %s1095 = smul.addr %s1094, 128
          %s1096 = scalar_lea.hbm %s7, %s1095
          %s1097 = sshll.u32 %s1087, 4
          %s1098 = int_to_ptr.vmem [resolvable:$true] %s1097
          %1103 = dma.vmem_to_hbm [thread:$0]  %s1098, 512, %s1096, %s1084, 128, 128, 8
        $region52: #{tpu_custom_call.1} parent=47 // pred_fallthru
          _
      $region48: #{tpu_custom_call.1} parent=5 // pred_fallthru
        _
      %p1104 = scmp.le.s32.totalorder 2, %s16
      // Predicated region
      $region53: #{tpu_custom_call.1} parent=5 // pred_check
        %p1105 = pneg %p1104
      $region54: #{tpu_custom_call.1} parent=5 // pred_check_branch
        %1107 = sbr.rel (%p1105) target = $region56
      $region55: #{tpu_custom_call.1} parent=5 // pred_region
        %s1108 = ssub.s32 %s16, 2
        // Predicated region
        $region57: #{tpu_custom_call.1} parent=55 // pred_check
          %p1109 = pneg %p202
        $region58: #{tpu_custom_call.1} parent=55 // pred_check_branch
          %1111 = sbr.rel (%p1109) target = $region60
        $region59: #{tpu_custom_call.1} parent=55 // pred_region
          %s1112 = sand.u32 %s187, 1
          %s1113 = scalar_lea.sflag [#allocation3], %s1112
          %s1114 = sand.u32 %s187, 1
          %s1115 = smul.addr %s1114, 32
          %s1116 = scalar_lea.vmem [#allocation2], %s1115
          %1117 = dma.done %s1113, 512
        $region60: #{tpu_custom_call.1} parent=55 // pred_fallthru
          _
      $region56: #{tpu_custom_call.1} parent=5 // pred_fallthru
        _
    $region6: #{tpu_custom_call.1} parent=1 // loop_footer
      %s20 = sadd.s32 1, %s16
    $region7: #{tpu_custom_call.1} parent=1 // loop_footer_branch
      %15 = sbr.rel target = $region3
    $region8: #{tpu_custom_call.1} parent=1 // loop_exit
      _
    %1118 = vsyncpa [#allocation3], 1
    %s1119 = scalar_lea.sflag [#allocation3], 1
    %1120 = vsyncpa %s1119, 1

</llo_original>
